<compile_context>
chip_gen: v6e
topology: v6e:2x2x1
jax: 0.10.0
libtpu: 0.0.40
codegen_flags: <defaults>
</compile_context>

<pallas_src>
import functools

import jax
import jax.numpy as jnp
from jax.experimental import pallas as pl
from jax.experimental.pallas import tpu as pltpu


def _cdiv(a, b):
    return -(-a // b)


def _round_up(a, m):
    return _cdiv(a, m) * m


def _vmem_capacity_bytes():
    try:
        return int(pltpu.get_tpu_info().vmem_capacity_bytes)
    except Exception:  # pragma: no cover - conservative default (v5e/v6e)
        return 128 << 20


def _split_dim(total, target, unit):
    """Balanced split of `total` into tiles of at most ~target.

    Returns (tile, num_tiles).  tile is a multiple of `unit` unless the whole
    dimension fits in a single tile, in which case tile == total (full dim)."""
    if total <= target:
        return total, 1
    n = _cdiv(total, target)
    tile = _round_up(_cdiv(total, n), unit)
    return tile, _cdiv(total, tile)


# ----------------------------- kernels --------------------------------------


def _mc_kernel_single(x_ref, w_ref, b_ref, o_ref, *, compute_dtype):
    # Whole K reduction fits one tile: plain dot + bias store, no accumulator.
    x = x_ref[...].astype(compute_dtype)
    acc = jnp.dot(x, w_ref[...], preferred_element_type=jnp.float32)
    o_ref[...] = (acc + b_ref[...]).astype(o_ref.dtype)


def _mc_kernel_multi(x_ref, w_ref, b_ref, o_ref, acc_ref, *, compute_dtype):
    k = pl.program_id(2)

    @pl.when(k == 0)
    def _():
        acc_ref[...] = jnp.zeros_like(acc_ref)

    x = x_ref[...].astype(compute_dtype)
    acc_ref[...] += jnp.dot(x, w_ref[...], preferred_element_type=jnp.float32)

    @pl.when(k == pl.num_programs(2) - 1)
    def _():
        o_ref[...] = (acc_ref[...] + b_ref[...]).astype(o_ref.dtype)


# ----------------------------- wrapper ---------------------------------------


def memory_compress(x, conv_weight, conv_bias, ratio, *, compute_dtype=jnp.bfloat16,
                    tm_target=None, tk_target=None, tn_target=None):
    """MemoryCompress.forward.  x: (B, L, D); conv_weight: (D_out, D_in, ratio); conv_bias: (D_out,).

    Returns (B, L // ratio, D_out).  compute_dtype feeds the MXU (accumulation is always f32);
    the output dtype follows x.  Trailing tokens (L % ratio) are dropped, matching PyTorch Conv1d.
    """
    B, L, D = x.shape
    D_out, D_in, R = conv_weight.shape
    assert R == ratio and D_in == D  # TODO(synk): grouped Conv1d (groups > 1) not implemented
    Lc = L // ratio
    if Lc * ratio != L:                      # PyTorch Conv1d silently drops the tail
        x = x[:, : Lc * ratio, :]
    out_dtype = x.dtype

    M = B * Lc
    K = ratio * D
    D_pad = _round_up(D_out, 128)            # lane-dense output columns

    x_itemsize = jnp.dtype(x.dtype).itemsize
    c_itemsize = jnp.dtype(compute_dtype).itemsize
    o_itemsize = jnp.dtype(out_dtype).itemsize

    # ---- generation-aware tile targets & VMEM budget ----
    cap = _vmem_capacity_bytes()
    big_vmem = cap >= (96 << 20)             # v5e/v6e: 128 MiB; v7x: 64 MiB
    tm_target = tm_target or (1024 if big_vmem else 512)
    tk_target = tk_target or 2048
    tn_target = tn_target or (2048 if big_vmem else 1024)
    budget = int(cap * 0.85)

    TK, nk = _split_dim(K, tk_target, 128)
    TN, nn = _split_dim(D_pad, tn_target, 128)
    if M <= tm_target:
        TM = M
    else:
        TM, _ = _split_dim(M, tm_target, 256 if tm_target >= 256 else 8)
    # Give both v7x TensorCores an M tile when the weight is resident (free on 1-TC chips).
    if nk == 1 and nn == 1 and _cdiv(M, TM) == 1 and M >= 16:
        TM = _round_up(_cdiv(M, 2), 8)

    def vmem_bytes(tm, tk, tn, k_steps):
        b = 2 * tm * tk * x_itemsize         # x tiles (double buffered, native dtype)
        b += 2 * tk * tn * c_itemsize        # weight tiles
        b += 2 * 8 * tn * 4                  # bias ((1, TN) padded to 8 sublanes)
        b += 2 * tm * tn * o_itemsize        # output tiles
        if k_steps > 1:
            b += tm * tn * 4                 # f32 accumulator scratch
        return b

    while vmem_bytes(TM, TK, TN, _cdiv(K, TK)) > budget:
        if TK > 512:
            TK = _round_up(TK // 2, 128)
        elif TN > 512:
            TN = _round_up(TN // 2, 128)
        elif TM > 256:
            TM = _round_up(TM // 2, 8)
        elif TK > 128:
            TK = _round_up(TK // 2, 128)
        elif TN > 128:
            TN = _round_up(TN // 2, 128)
        elif TM > 8:
            TM = _round_up(TM // 2, 8)
        else:
            break

    nk = _cdiv(K, TK)
    nn = _cdiv(D_pad, TN)
    nm = _cdiv(M, TM)
    K_pad = nk * TK                          # == K whenever nk == 1 (TK is then the full dim)
    N_pad = nn * TN
    resident_weight = (nk == 1 and nn == 1)

    # ---- glue (plain JAX; no extra pass over x unless K must be zero-padded) ----
    x2d = x.reshape(M, K)                    # contiguous reshape: metadata only
    if K_pad != K:                           # only when the K reduction is split unevenly
        x2d = jnp.pad(x2d, ((0, 0), (0, K_pad - K)))
    # W[o, i, r] -> (K, D_out) with K index = r*D + i, matching the patch flatten of x.
    w2d = jnp.transpose(conv_weight, (0, 2, 1)).reshape(D_out, K).T.astype(compute_dtype)
    b2d = conv_bias.reshape(1, D_out).astype(jnp.float32)
    if K_pad != K or N_pad != D_out:
        w2d = jnp.pad(w2d, ((0, K_pad - K), (0, N_pad - D_out)))
    if N_pad != D_out:
        b2d = jnp.pad(b2d, ((0, 0), (0, N_pad - D_out)))

    needed = vmem_bytes(TM, TK, TN, nk)
    vmem_limit = max(32 << 20, min(int(needed * 1.4) + (2 << 20), int(cap * 0.92)))

    # Weight is re-streamed once per M tile whenever the K/N grid has more than one step.
    weight_streams = 1 if resident_weight else nm
    cost = pl.CostEstimate(
        flops=2 * M * K * D_out,
        bytes_accessed=(M * K * x_itemsize
                        + weight_streams * K_pad * N_pad * c_itemsize
                        + M * N_pad * o_itemsize
                        + N_pad * 4),
        transcendentals=0,
    )

    if nk == 1:
        kernel = functools.partial(_mc_kernel_single, compute_dtype=compute_dtype)
        scratch = []
    else:
        kernel = functools.partial(_mc_kernel_multi, compute_dtype=compute_dtype)
        scratch = [pltpu.VMEM((TM, TN), jnp.float32)]

    def _spec(shape, index_map, mode):
        if mode is None:
            return pl.BlockSpec(shape, index_map)
        return pl.BlockSpec(shape, index_map, pipeline_mode=mode)

    def build(wb_mode):
        return pl.pallas_call(
            kernel,
            out_shape=jax.ShapeDtypeStruct((M, N_pad), out_dtype),
            grid_spec=pltpu.PrefetchScalarGridSpec(
                num_scalar_prefetch=0,
                grid=(nm, nn, nk),
                in_specs=[
                    pl.BlockSpec((TM, TK), lambda i, j, k: (i, k)),          # x tile
                    _spec((TK, TN), lambda i, j, k: (k, j), wb_mode),        # weight tile
                    _spec((1, TN), lambda i, j, k: (0, j), wb_mode),         # bias
                ],
                out_specs=pl.BlockSpec((TM, TN), lambda i, j, k: (i, j)),
                scratch_shapes=scratch,
            ),
            compiler_params=pltpu.CompilerParams(
                dimension_semantics=("parallel", "parallel", "arbitrary"),
                vmem_limit_bytes=vmem_limit,
            ),
            cost_estimate=cost,
        )

    if resident_weight:
        # Constant weight/bias block index -> fetched once; a single buffer suffices.
        try:
            out2d = build(pl.Buffered(1))(x2d, w2d, b2d)
        except Exception:  # pragma: no cover - fall back if Buffered(1) is unsupported
            out2d = build(None)(x2d, w2d, b2d)
    else:
        out2d = build(None)(x2d, w2d, b2d)

    if N_pad != D_out:
        out2d = out2d[:, :D_out]
    return out2d.reshape(B, Lc, D_out)


# ----------------------------- demo / self-test -------------------------------

if __name__ == "__main__":
    def reference(x, w, b, ratio):
        B, L, D = x.shape
        Lc = L // ratio
        xp = x[:, : Lc * ratio, :].reshape(B, Lc, ratio, D)
        return jnp.einsum("btri,oir->bto", xp, w) + b

    key = jax.random.PRNGKey(0)

    # Case 1: canonical small MemoryCompress shape (D not a multiple of 128 -> lane padding path).
    B, L, D, ratio = 2, 16, 32, 4
    k1, k2, k3, key = jax.random.split(key, 4)
    bound = 1.0 / (D * ratio) ** 0.5
    w1 = jax.random.uniform(k1, (D, D, ratio), jnp.float32, -bound, bound)
    b1 = jax.random.uniform(k2, (D,), jnp.float32, -bound, bound)
    x1 = jax.random.normal(k3, (B, L, D), jnp.float32)
    ref1 = reference(x1, w1, b1, ratio)

    out1 = jax.block_until_ready(memory_compress(x1, w1, b1, ratio, compute_dtype=jnp.float32))
    assert out1.shape == (B, L // ratio, D)
    assert jnp.allclose(out1, ref1, atol=1e-4, rtol=1e-4), "case 1 (f32) mismatch"

    out1_bf16 = jax.block_until_ready(memory_compress(x1, w1, b1, ratio))
    assert jnp.allclose(out1_bf16, ref1, atol=3e-2, rtol=3e-2), "case 1 (bf16) mismatch"

    # Case 2: D a multiple of 128 (no lane padding), multiple parallel M tiles.
    B, L, D, ratio = 2, 32, 128, 2
    k1, k2, k3, key = jax.random.split(key, 4)
    bound = 1.0 / (D * ratio) ** 0.5
    w2 = jax.random.uniform(k1, (D, D, ratio), jnp.float32, -bound, bound)
    b2 = jax.random.uniform(k2, (D,), jnp.float32, -bound, bound)
    x2 = jax.random.normal(k3, (B, L, D), jnp.float32)
    out2 = jax.block_until_ready(
        memory_compress(x2, w2, b2, ratio, compute_dtype=jnp.float32, tm_target=16))
    assert jnp.allclose(out2, reference(x2, w2, b2, ratio), atol=1e-4, rtol=1e-4), "case 2 mismatch"

    # Case 3: force the multi-step K reduction (f32 VMEM accumulator path).
    B, L, D, ratio = 2, 32, 32, 8
    k1, k2, k3, key = jax.random.split(key, 4)
    bound = 1.0 / (D * ratio) ** 0.5
    w3 = jax.random.uniform(k1, (D, D, ratio), jnp.float32, -bound, bound)
    b3 = jax.random.uniform(k2, (D,), jnp.float32, -bound, bound)
    x3 = jax.random.normal(k3, (B, L, D), jnp.float32)
    out3 = jax.block_until_ready(
        memory_compress(x3, w3, b3, ratio, compute_dtype=jnp.float32, tk_target=128))
    assert jnp.allclose(out3, reference(x3, w3, b3, ratio), atol=1e-4, rtol=1e-4), "case 3 mismatch"

    print("KERNEL_OK")
</pallas_src>

<mosaic_0001>
module attributes {stable_mosaic.version = 11 : i64} {
  func.func @_mc_kernel_single(%arg0: i32, %arg1: i32, %arg2: i32, %arg3: memref<8x128xf32, #tpu.memory_space<vmem>>, %arg4: memref<128x128xf32, #tpu.memory_space<vmem>>, %arg5: memref<1x128xf32, #tpu.memory_space<vmem>>, %arg6: memref<8x128xf32, #tpu.memory_space<vmem>>) attributes {dimension_semantics = [#tpu.dimension_semantics<parallel>, #tpu.dimension_semantics<parallel>, #tpu.dimension_semantics<arbitrary>], iteration_bounds = array<i64: 1, 1, 1>, scalar_prefetch = 0 : i64, scratch_operands = 0 : i64, tpu.core_type = #tpu.core_type<tc>, window_params = [{transform_indices = @transform_0, window_bounds = array<i64: 8, 128>}, {pipeline_mode = #tpu.pipeline_mode<synchronous>, transform_indices = @transform_1, window_bounds = array<i64: 128, 128>}, {pipeline_mode = #tpu.pipeline_mode<synchronous>, transform_indices = @transform_2, window_bounds = array<i64: 1, 128>}, {transform_indices = @transform_3, window_bounds = array<i64: 8, 128>}]} {
    %c0 = arith.constant 0 : index
    %c0_0 = arith.constant 0 : index
    %0 = vector.load %arg3[%c0, %c0_0] : memref<8x128xf32, #tpu.memory_space<vmem>>, vector<8x128xf32>
    %c0_1 = arith.constant 0 : index
    %c0_2 = arith.constant 0 : index
    %1 = vector.load %arg4[%c0_1, %c0_2] : memref<128x128xf32, #tpu.memory_space<vmem>>, vector<128x128xf32>
    %cst = arith.constant dense<0.000000e+00> : vector<8x128xf32>
    %2 = tpu.matmul %0, %1, %cst {dimension_numbers = #tpu.dot_dimension_numbers<[1], [0], [0], [1], [0, 0, 1, 1], [], []>} : vector<8x128xf32>, vector<128x128xf32>, vector<8x128xf32> -> vector<8x128xf32>
    %c0_3 = arith.constant 0 : index
    %c0_4 = arith.constant 0 : index
    %3 = vector.load %arg5[%c0_3, %c0_4] : memref<1x128xf32, #tpu.memory_space<vmem>>, vector<1x128xf32>
    %4 = vector.broadcast %3 : vector<1x128xf32> to vector<8x128xf32>
    %5 = arith.addf %2, %4 : vector<8x128xf32>
    %c0_5 = arith.constant 0 : index
    %c0_6 = arith.constant 0 : index
    %6 = vector.load %arg6[%c0_5, %c0_6] : memref<8x128xf32, #tpu.memory_space<vmem>>, vector<8x128xf32>
    tpu.vector_store %arg6[%c0_5, %c0_6], %5 {strides = array<i32>} : memref<8x128xf32, #tpu.memory_space<vmem>>, vector<8x128xf32>,
    return
  }
  func.func @transform_0(%arg0: i32, %arg1: i32, %arg2: i32) -> (i32, i32) {
    %c0_i32 = arith.constant 0 : i32
    return %arg0, %arg2 : i32, i32
  }
  func.func @transform_1(%arg0: i32, %arg1: i32, %arg2: i32) -> (i32, i32) {
    %c0_i32 = arith.constant 0 : i32
    return %arg2, %arg1 : i32, i32
  }
  func.func @transform_2(%arg0: i32, %arg1: i32, %arg2: i32) -> (i32, i32) {
    %c0_i32 = arith.constant 0 : i32
    %c0_i32_0 = arith.constant 0 : i32
    return %c0_i32, %arg1 : i32, i32
  }
  func.func @transform_3(%arg0: i32, %arg1: i32, %arg2: i32) -> (i32, i32) {
    %c0_i32 = arith.constant 0 : i32
    return %arg0, %arg1 : i32, i32
  }
}

module attributes {stable_mosaic.version = 11 : i64} {
  func.func @_mc_kernel_single(%arg0: i32, %arg1: i32, %arg2: i32, %arg3: memref<8x128xf32, #tpu.memory_space<vmem>>, %arg4: memref<128x128xf32, #tpu.memory_space<vmem>>, %arg5: memref<1x128xf32, #tpu.memory_space<vmem>>, %arg6: memref<8x128xf32, #tpu.memory_space<vmem>>) attributes {dimension_semantics = [#tpu.dimension_semantics<parallel>, #tpu.dimension_semantics<parallel>, #tpu.dimension_semantics<arbitrary>], iteration_bounds = array<i64: 1, 1, 1>, scalar_prefetch = 0 : i64, scratch_operands = 0 : i64, tpu.core_type = #tpu.core_type<tc>, window_params = [{transform_indices = @transform_0, window_bounds = array<i64: 8, 128>}, {transform_indices = @transform_1, window_bounds = array<i64: 128, 128>}, {transform_indices = @transform_2, window_bounds = array<i64: 1, 128>}, {transform_indices = @transform_3, window_bounds = array<i64: 8, 128>}]} {
    %c0 = arith.constant 0 : index
    %c0_0 = arith.constant 0 : index
    %0 = vector.load %arg3[%c0, %c0_0] : memref<8x128xf32, #tpu.memory_space<vmem>>, vector<8x128xf32>
    %c0_1 = arith.constant 0 : index
    %c0_2 = arith.constant 0 : index
    %1 = vector.load %arg4[%c0_1, %c0_2] : memref<128x128xf32, #tpu.memory_space<vmem>>, vector<128x128xf32>
    %cst = arith.constant dense<0.000000e+00> : vector<8x128xf32>
    %2 = tpu.matmul %0, %1, %cst {dimension_numbers = #tpu.dot_dimension_numbers<[1], [0], [0], [1], [0, 0, 1, 1], [], []>} : vector<8x128xf32>, vector<128x128xf32>, vector<8x128xf32> -> vector<8x128xf32>
    %c0_3 = arith.constant 0 : index
    %c0_4 = arith.constant 0 : index
    %3 = vector.load %arg5[%c0_3, %c0_4] : memref<1x128xf32, #tpu.memory_space<vmem>>, vector<1x128xf32>
    %4 = vector.broadcast %3 : vector<1x128xf32> to vector<8x128xf32>
    %5 = arith.addf %2, %4 : vector<8x128xf32>
    %c0_5 = arith.constant 0 : index
    %c0_6 = arith.constant 0 : index
    %6 = vector.load %arg6[%c0_5, %c0_6] : memref<8x128xf32, #tpu.memory_space<vmem>>, vector<8x128xf32>
    tpu.vector_store %arg6[%c0_5, %c0_6], %5 {strides = array<i32>} : memref<8x128xf32, #tpu.memory_space<vmem>>, vector<8x128xf32>,
    return
  }
  func.func @transform_0(%arg0: i32, %arg1: i32, %arg2: i32) -> (i32, i32) {
    %c0_i32 = arith.constant 0 : i32
    return %arg0, %arg2 : i32, i32
  }
  func.func @transform_1(%arg0: i32, %arg1: i32, %arg2: i32) -> (i32, i32) {
    %c0_i32 = arith.constant 0 : i32
    return %arg2, %arg1 : i32, i32
  }
  func.func @transform_2(%arg0: i32, %arg1: i32, %arg2: i32) -> (i32, i32) {
    %c0_i32 = arith.constant 0 : i32
    %c0_i32_0 = arith.constant 0 : i32
    return %c0_i32, %arg1 : i32, i32
  }
  func.func @transform_3(%arg0: i32, %arg1: i32, %arg2: i32) -> (i32, i32) {
    %c0_i32 = arith.constant 0 : i32
    return %arg0, %arg1 : i32, i32
  }
}

</mosaic_0001>

<llo_original>
// kernel: tpu_custom_call.1
$region0: #{tpu_custom_call.1}
  #allocation0 [shape = 'u32[]', space=smem, size = 0x4, offset = 0x4, fixed_abs, tag = 'smem constant byte address 0x4 - core index']
  #allocation1 [shape = 'u32[144,128]{1,0:T(1,128)}', space=vmem, size = 0x12000, scoped, tag = 'internal scratch']
  %s0 = inlined_call_operand.hbm [shape: f32[8,128], index: 0, kind: input, shape index: {}]
  %s1 = inlined_call_operand.hbm [shape: f32[128,128], index: 1, kind: input, shape index: {}]
  %s2 = inlined_call_operand.vmem [shape: f32[1,128], index: 2, kind: input, shape index: {}]
  %s3 = inlined_call_operand.hbm [shape: f32[8,128], index: 3, kind: output, shape index: {}]
  %s4 = sld [smem:[#allocation0]]
  $region30: #{tpu_custom_call.1} parent=0
    _
  %s6 = ssub.s32 1, %s4
  %s7 = scalar_select 0, %s6, %s4
  $region1: #{tpu_custom_call.1} parent=0
    #allocation2 [shape = 'u8[4096]{0}', space=vmem, size = 0x1000, scoped, tag = 'input window, operand 0, single buffered']
    #allocation3 [shape = 's32[1]{0}', space=sflag, size = 0x4, scoped, tag = 'scoped memory for tpu_custom_call.1']
    #allocation4 [shape = 's32[1]{0}', space=sflag, size = 0x4, scoped, tag = 'scoped memory for tpu_custom_call.1']
    #allocation5 [shape = 'u8[65536]{0}', space=vmem, size = 0x10000, scoped, tag = 'input window, operand 1, single buffered']
    #allocation6 [shape = 's32[1]{0}', space=sflag, size = 0x4, scoped, tag = 'scoped memory for tpu_custom_call.1']
    #allocation7 [shape = 'u8[4096]{0}', space=vmem, size = 0x1000, scoped, tag = 'output window, operand 0, single buffered']
    %8 = vsyncpa [#allocation3], 0
    %9 = vsyncpa [#allocation6], 0
    %10 = vsyncpa [#allocation4], 0
    // Predicated region
    $region2: #{tpu_custom_call.1} parent=1 // pred_check
      _
    $region3: #{tpu_custom_call.1} parent=1 // pred_check_branch
      %12 = sbr.rel (0) target = $region5
    $region4: #{tpu_custom_call.1} parent=1 // pred_region
      %s14 = ssub.s32 128, 128
      %15 = vsyncadd [#allocation3], %s14
      %s17 = sshll.u32 [#allocation2], 4
      %s18 = int_to_ptr.vmem [resolvable:$true] %s17
      %20 = dma.hbm_to_vmem [thread:$0]  %s0, 128, %s18, [#allocation3]
    $region5: #{tpu_custom_call.1} parent=1 // pred_fallthru
      _
    // Predicated region
    $region6: #{tpu_custom_call.1} parent=1 // pred_check
      _
    $region7: #{tpu_custom_call.1} parent=1 // pred_check_branch
      %22 = sbr.rel (0) target = $region9
    $region8: #{tpu_custom_call.1} parent=1 // pred_region
      %s24 = ssub.s32 2048, 2048
      %25 = vsyncadd [#allocation6], %s24
      %s26 = sshll.u32 [#allocation5], 4
      %s27 = int_to_ptr.vmem [resolvable:$true] %s26
      %32 = dma.hbm_to_vmem [thread:$0]  %s1, 2048, %s27, [#allocation6], 128, 128, 8
    $region9: #{tpu_custom_call.1} parent=1 // pred_fallthru
      _
    // Predicated region
    $region10: #{tpu_custom_call.1} parent=1 // pred_check
      _
    $region11: #{tpu_custom_call.1} parent=1 // pred_check_branch
      %34 = sbr.rel (0) target = $region13
    $region12: #{tpu_custom_call.1} parent=1 // pred_region
      _
    $region13: #{tpu_custom_call.1} parent=1 // pred_fallthru
      _
    // Predicated region
    $region14: #{tpu_custom_call.1} parent=1 // pred_check
      _
    $region15: #{tpu_custom_call.1} parent=1 // pred_check_branch
      %36 = sbr.rel (0) target = $region17
    $region16: #{tpu_custom_call.1} parent=1 // pred_region
      %37 = dma.done [#allocation3], 128
    $region17: #{tpu_custom_call.1} parent=1 // pred_fallthru
      _
    // Predicated region
    $region18: #{tpu_custom_call.1} parent=1 // pred_check
      _
    $region19: #{tpu_custom_call.1} parent=1 // pred_check_branch
      %39 = sbr.rel (0) target = $region21
    $region20: #{tpu_custom_call.1} parent=1 // pred_region
      %40 = dma.done [#allocation6], 2048
    $region21: #{tpu_custom_call.1} parent=1 // pred_fallthru
      _
    %v41 = vld [vmem:[#allocation2] sm:$0xff]
    %v42 = vld [vmem:[#allocation5] sm:$0xff]
    %v43 = vld [vmem:[#allocation5 + $0x8] sm:$0xff]
    %v44 = vld [vmem:[#allocation5 + $0x10] sm:$0xff]
    %v45 = vld [vmem:[#allocation5 + $0x18] sm:$0xff]
    %v46 = vld [vmem:[#allocation5 + $0x20] sm:$0xff]
    %v47 = vld [vmem:[#allocation5 + $0x28] sm:$0xff]
    %v48 = vld [vmem:[#allocation5 + $0x30] sm:$0xff]
    %v49 = vld [vmem:[#allocation5 + $0x38] sm:$0xff]
    %v50 = vld [vmem:[#allocation5 + $0x40] sm:$0xff]
    %v51 = vld [vmem:[#allocation5 + $0x48] sm:$0xff]
    %v52 = vld [vmem:[#allocation5 + $0x50] sm:$0xff]
    %v53 = vld [vmem:[#allocation5 + $0x58] sm:$0xff]
    %v54 = vld [vmem:[#allocation5 + $0x60] sm:$0xff]
    %v55 = vld [vmem:[#allocation5 + $0x68] sm:$0xff]
    %v56 = vld [vmem:[#allocation5 + $0x70] sm:$0xff]
    %v57 = vld [vmem:[#allocation5 + $0x78] sm:$0xff]
    %v58 = vld [vmem:[%s2] sm:$0x1]
    %v60 = vlaneseq
    %v61 = vshrl.u32 %v60, 7
    %v62 = vsub.s32 0, %v61
    %v63 = vrot.slane %v58, %v62
    %65 = vmatprep.subr.mxu0 0.0
    %66 = vmatpush1.msra.mxu0 %v57
    %67 = vmatprep.subr.mxu0 0.0
    %68 = vmatpush1.msra.mxu0 %v56
    %69 = vmatprep.subr.mxu0 0.0
    %70 = vmatpush1.msra.mxu0 %v55
    %71 = vmatprep.subr.mxu0 0.0
    %72 = vmatpush1.msra.mxu0 %v54
    %73 = vmatprep.subr.mxu0 0.0
    %74 = vmatpush1.msra.mxu0 %v53
    %75 = vmatprep.subr.mxu0 0.0
    %76 = vmatpush1.msra.mxu0 %v52
    %77 = vmatprep.subr.mxu0 0.0
    %78 = vmatpush1.msra.mxu0 %v51
    %79 = vmatprep.subr.mxu0 0.0
    %80 = vmatpush1.msra.mxu0 %v50
    %81 = vmatprep.subr.mxu0 0.0
    %82 = vmatpush1.msra.mxu0 %v49
    %83 = vmatprep.subr.mxu0 0.0
    %84 = vmatpush1.msra.mxu0 %v48
    %85 = vmatprep.subr.mxu0 0.0
    %86 = vmatpush1.msra.mxu0 %v47
    %87 = vmatprep.subr.mxu0 0.0
    %88 = vmatpush1.msra.mxu0 %v46
    %89 = vmatprep.subr.mxu0 0.0
    %90 = vmatpush1.msra.mxu0 %v45
    %91 = vmatprep.subr.mxu0 0.0
    %92 = vmatpush1.msra.mxu0 %v44
    %93 = vmatprep.subr.mxu0 0.0
    %94 = vmatpush1.msra.mxu0 %v43
    %95 = vmatprep.subr.mxu0 0.0
    %96 = vmatpush1.msra.mxu0 %v42
    %97 = vmatprep.subr.mxu0 0.0
    %98 = vmatpush2.msra.mxu0 0.0
    %99 = vmatprep.subr.mxu0 0.0
    %100 = vmatpush2.msra.mxu0 0.0
    %101 = vmatprep.subr.mxu0 0.0
    %102 = vmatpush2.msra.mxu0 0.0
    %103 = vmatprep.subr.mxu0 0.0
    %104 = vmatpush2.msra.mxu0 0.0
    %105 = vmatprep.subr.mxu0 0.0
    %106 = vmatpush2.msra.mxu0 0.0
    %107 = vmatprep.subr.mxu0 0.0
    %108 = vmatpush2.msra.mxu0 0.0
    %109 = vmatprep.subr.mxu0 0.0
    %110 = vmatpush2.msra.mxu0 0.0
    %111 = vmatprep.subr.mxu0 0.0
    %112 = vmatpush2.msra.mxu0 0.0
    %113 = vmatprep.subr.mxu0 0.0
    %114 = vmatpush2.msra.mxu0 0.0
    %115 = vmatprep.subr.mxu0 0.0
    %116 = vmatpush2.msra.mxu0 0.0
    %117 = vmatprep.subr.mxu0 0.0
    %118 = vmatpush2.msra.mxu0 0.0
    %119 = vmatprep.subr.mxu0 0.0
    %120 = vmatpush2.msra.mxu0 0.0
    %121 = vmatprep.subr.mxu0 0.0
    %122 = vmatpush2.msra.mxu0 0.0
    %123 = vmatprep.subr.mxu0 0.0
    %124 = vmatpush2.msra.mxu0 0.0
    %125 = vmatprep.subr.mxu0 0.0
    %126 = vmatpush2.msra.mxu0 0.0
    %127 = vmatprep.subr.mxu0 0.0
    %128 = vmatpush2.msra.mxu0 0.0
    %129 = vmatprep.mubr.f32.mxu0 0.0
    %130 = vmatmul.mubr.f32.gmra.mxu0 %v41
    %v131 = vpop.f32.mrf.mxu0
    %v132 = vadd.f32 %v63, %v131
    %v133 = vpop.f32.mrf.mxu0
    %134 = vdwg.mxu0
    %135 = vst [vmem:[#allocation7] sm:$0xff] %v132
    // Predicated region
    $region22: #{tpu_custom_call.1} parent=1 // pred_check
      _
    $region23: #{tpu_custom_call.1} parent=1 // pred_check_branch
      %137 = sbr.rel (0) target = $region25
    $region24: #{tpu_custom_call.1} parent=1 // pred_region
      %s139 = ssub.s32 128, 128
      %140 = vsyncadd [#allocation4], %s139
      %s142 = sshll.u32 [#allocation7], 4
      %s143 = int_to_ptr.vmem [resolvable:$true] %s142
      %145 = dma.vmem_to_hbm [thread:$0]  %s143, 128, %s3, [#allocation4]
    $region25: #{tpu_custom_call.1} parent=1 // pred_fallthru
      _
    // Predicated region
    $region26: #{tpu_custom_call.1} parent=1 // pred_check
      _
    $region27: #{tpu_custom_call.1} parent=1 // pred_check_branch
      %147 = sbr.rel (0) target = $region29
    $region28: #{tpu_custom_call.1} parent=1 // pred_region
      %148 = dma.done [#allocation4], 128
    $region29: #{tpu_custom_call.1} parent=1 // pred_fallthru
      _
    %149 = vsyncpa [#allocation3], 1
    %150 = vsyncpa [#allocation6], 1
    %151 = vsyncpa [#allocation4], 1

// kernel: tpu_custom_call.1
$region0: #{tpu_custom_call.1}
  #allocation0 [shape = 'u32[]', space=smem, size = 0x4, offset = 0x4, fixed_abs, tag = 'smem constant byte address 0x4 - core index']
  #allocation1 [shape = 'u32[144,128]{1,0:T(1,128)}', space=vmem, size = 0x12000, scoped, tag = 'internal scratch']
  %s0 = inlined_call_operand.hbm [shape: f32[8,128], index: 0, kind: input, shape index: {}]
  %s1 = inlined_call_operand.hbm [shape: f32[128,128], index: 1, kind: input, shape index: {}]
  %s2 = inlined_call_operand.vmem [shape: f32[1,128], index: 2, kind: input, shape index: {}]
  %s3 = inlined_call_operand.hbm [shape: f32[8,128], index: 3, kind: output, shape index: {}]
  %s4 = sld [smem:[#allocation0]]
  $region30: #{tpu_custom_call.1} parent=0
    _
  %s6 = ssub.s32 1, %s4
  %s7 = scalar_select 0, %s6, %s4
  $region1: #{tpu_custom_call.1} parent=0
    #allocation2 [shape = 'u8[4096]{0}', space=vmem, size = 0x1000, scoped, tag = 'input window, operand 0, single buffered']
    #allocation3 [shape = 's32[1]{0}', space=sflag, size = 0x4, scoped, tag = 'scoped memory for tpu_custom_call.1']
    #allocation4 [shape = 's32[1]{0}', space=sflag, size = 0x4, scoped, tag = 'scoped memory for tpu_custom_call.1']
    #allocation5 [shape = 'u8[65536]{0}', space=vmem, size = 0x10000, scoped, tag = 'input window, operand 1, single buffered']
    #allocation6 [shape = 's32[1]{0}', space=sflag, size = 0x4, scoped, tag = 'scoped memory for tpu_custom_call.1']
    #allocation7 [shape = 'u8[4096]{0}', space=vmem, size = 0x1000, scoped, tag = 'output window, operand 0, single buffered']
    %8 = vsyncpa [#allocation3], 0
    %9 = vsyncpa [#allocation6], 0
    %10 = vsyncpa [#allocation4], 0
    // Predicated region
    $region2: #{tpu_custom_call.1} parent=1 // pred_check
      _
    $region3: #{tpu_custom_call.1} parent=1 // pred_check_branch
      %12 = sbr.rel (0) target = $region5
    $region4: #{tpu_custom_call.1} parent=1 // pred_region
      %s14 = ssub.s32 128, 128
      %15 = vsyncadd [#allocation3], %s14
      %s17 = sshll.u32 [#allocation2], 4
      %s18 = int_to_ptr.vmem [resolvable:$true] %s17
      %20 = dma.hbm_to_vmem [thread:$0]  %s0, 128, %s18, [#allocation3]
    $region5: #{tpu_custom_call.1} parent=1 // pred_fallthru
      _
    // Predicated region
    $region6: #{tpu_custom_call.1} parent=1 // pred_check
      _
    $region7: #{tpu_custom_call.1} parent=1 // pred_check_branch
      %22 = sbr.rel (0) target = $region9
    $region8: #{tpu_custom_call.1} parent=1 // pred_region
      %s24 = ssub.s32 2048, 2048
      %25 = vsyncadd [#allocation6], %s24
      %s26 = sshll.u32 [#allocation5], 4
      %s27 = int_to_ptr.vmem [resolvable:$true] %s26
      %32 = dma.hbm_to_vmem [thread:$0]  %s1, 2048, %s27, [#allocation6], 128, 128, 8
    $region9: #{tpu_custom_call.1} parent=1 // pred_fallthru
      _
    // Predicated region
    $region10: #{tpu_custom_call.1} parent=1 // pred_check
      _
    $region11: #{tpu_custom_call.1} parent=1 // pred_check_branch
      %34 = sbr.rel (0) target = $region13
    $region12: #{tpu_custom_call.1} parent=1 // pred_region
      _
    $region13: #{tpu_custom_call.1} parent=1 // pred_fallthru
      _
    // Predicated region
    $region14: #{tpu_custom_call.1} parent=1 // pred_check
      _
    $region15: #{tpu_custom_call.1} parent=1 // pred_check_branch
      %36 = sbr.rel (0) target = $region17
    $region16: #{tpu_custom_call.1} parent=1 // pred_region
      %37 = dma.done [#allocation3], 128
    $region17: #{tpu_custom_call.1} parent=1 // pred_fallthru
      _
    // Predicated region
    $region18: #{tpu_custom_call.1} parent=1 // pred_check
      _
    $region19: #{tpu_custom_call.1} parent=1 // pred_check_branch
      %39 = sbr.rel (0) target = $region21
    $region20: #{tpu_custom_call.1} parent=1 // pred_region
      %40 = dma.done [#allocation6], 2048
    $region21: #{tpu_custom_call.1} parent=1 // pred_fallthru
      _
    %v41 = vld [vmem:[#allocation2] sm:$0xff]
    %v42 = vld [vmem:[#allocation5] sm:$0xff]
    %v43 = vld [vmem:[#allocation5 + $0x8] sm:$0xff]
    %v44 = vld [vmem:[#allocation5 + $0x10] sm:$0xff]
    %v45 = vld [vmem:[#allocation5 + $0x18] sm:$0xff]
    %v46 = vld [vmem:[#allocation5 + $0x20] sm:$0xff]
    %v47 = vld [vmem:[#allocation5 + $0x28] sm:$0xff]
    %v48 = vld [vmem:[#allocation5 + $0x30] sm:$0xff]
    %v49 = vld [vmem:[#allocation5 + $0x38] sm:$0xff]
    %v50 = vld [vmem:[#allocation5 + $0x40] sm:$0xff]
    %v51 = vld [vmem:[#allocation5 + $0x48] sm:$0xff]
    %v52 = vld [vmem:[#allocation5 + $0x50] sm:$0xff]
    %v53 = vld [vmem:[#allocation5 + $0x58] sm:$0xff]
    %v54 = vld [vmem:[#allocation5 + $0x60] sm:$0xff]
    %v55 = vld [vmem:[#allocation5 + $0x68] sm:$0xff]
    %v56 = vld [vmem:[#allocation5 + $0x70] sm:$0xff]
    %v57 = vld [vmem:[#allocation5 + $0x78] sm:$0xff]
    %v58 = vld [vmem:[%s2] sm:$0x1]
    %v60 = vlaneseq
    %v61 = vshrl.u32 %v60, 7
    %v62 = vsub.s32 0, %v61
    %v63 = vrot.slane %v58, %v62
    %65 = vmatprep.subr.mxu0 0.0
    %66 = vmatpush1.msra.mxu0 %v57
    %67 = vmatprep.subr.mxu0 0.0
    %68 = vmatpush1.msra.mxu0 %v56
    %69 = vmatprep.subr.mxu0 0.0
    %70 = vmatpush1.msra.mxu0 %v55
    %71 = vmatprep.subr.mxu0 0.0
    %72 = vmatpush1.msra.mxu0 %v54
    %73 = vmatprep.subr.mxu0 0.0
    %74 = vmatpush1.msra.mxu0 %v53
    %75 = vmatprep.subr.mxu0 0.0
    %76 = vmatpush1.msra.mxu0 %v52
    %77 = vmatprep.subr.mxu0 0.0
    %78 = vmatpush1.msra.mxu0 %v51
    %79 = vmatprep.subr.mxu0 0.0
    %80 = vmatpush1.msra.mxu0 %v50
    %81 = vmatprep.subr.mxu0 0.0
    %82 = vmatpush1.msra.mxu0 %v49
    %83 = vmatprep.subr.mxu0 0.0
    %84 = vmatpush1.msra.mxu0 %v48
    %85 = vmatprep.subr.mxu0 0.0
    %86 = vmatpush1.msra.mxu0 %v47
    %87 = vmatprep.subr.mxu0 0.0
    %88 = vmatpush1.msra.mxu0 %v46
    %89 = vmatprep.subr.mxu0 0.0
    %90 = vmatpush1.msra.mxu0 %v45
    %91 = vmatprep.subr.mxu0 0.0
    %92 = vmatpush1.msra.mxu0 %v44
    %93 = vmatprep.subr.mxu0 0.0
    %94 = vmatpush1.msra.mxu0 %v43
    %95 = vmatprep.subr.mxu0 0.0
    %96 = vmatpush1.msra.mxu0 %v42
    %97 = vmatprep.subr.mxu0 0.0
    %98 = vmatpush2.msra.mxu0 0.0
    %99 = vmatprep.subr.mxu0 0.0
    %100 = vmatpush2.msra.mxu0 0.0
    %101 = vmatprep.subr.mxu0 0.0
    %102 = vmatpush2.msra.mxu0 0.0
    %103 = vmatprep.subr.mxu0 0.0
    %104 = vmatpush2.msra.mxu0 0.0
    %105 = vmatprep.subr.mxu0 0.0
    %106 = vmatpush2.msra.mxu0 0.0
    %107 = vmatprep.subr.mxu0 0.0
    %108 = vmatpush2.msra.mxu0 0.0
    %109 = vmatprep.subr.mxu0 0.0
    %110 = vmatpush2.msra.mxu0 0.0
    %111 = vmatprep.subr.mxu0 0.0
    %112 = vmatpush2.msra.mxu0 0.0
    %113 = vmatprep.subr.mxu0 0.0
    %114 = vmatpush2.msra.mxu0 0.0
    %115 = vmatprep.subr.mxu0 0.0
    %116 = vmatpush2.msra.mxu0 0.0
    %117 = vmatprep.subr.mxu0 0.0
    %118 = vmatpush2.msra.mxu0 0.0
    %119 = vmatprep.subr.mxu0 0.0
    %120 = vmatpush2.msra.mxu0 0.0
    %121 = vmatprep.subr.mxu0 0.0
    %122 = vmatpush2.msra.mxu0 0.0
    %123 = vmatprep.subr.mxu0 0.0
    %124 = vmatpush2.msra.mxu0 0.0
    %125 = vmatprep.subr.mxu0 0.0
    %126 = vmatpush2.msra.mxu0 0.0
    %127 = vmatprep.subr.mxu0 0.0
    %128 = vmatpush2.msra.mxu0 0.0
    %129 = vmatprep.mubr.f32.mxu0 0.0
    %130 = vmatmul.mubr.f32.gmra.mxu0 %v41
    %v131 = vpop.f32.mrf.mxu0
    %v132 = vadd.f32 %v63, %v131
    %v133 = vpop.f32.mrf.mxu0
    %134 = vdwg.mxu0
    %135 = vst [vmem:[#allocation7] sm:$0xff] %v132
    // Predicated region
    $region22: #{tpu_custom_call.1} parent=1 // pred_check
      _
    $region23: #{tpu_custom_call.1} parent=1 // pred_check_branch
      %137 = sbr.rel (0) target = $region25
    $region24: #{tpu_custom_call.1} parent=1 // pred_region
      %s139 = ssub.s32 128, 128
      %140 = vsyncadd [#allocation4], %s139
      %s142 = sshll.u32 [#allocation7], 4
      %s143 = int_to_ptr.vmem [resolvable:$true] %s142
      %145 = dma.vmem_to_hbm [thread:$0]  %s143, 128, %s3, [#allocation4]
    $region25: #{tpu_custom_call.1} parent=1 // pred_fallthru
      _
    // Predicated region
    $region26: #{tpu_custom_call.1} parent=1 // pred_check
      _
    $region27: #{tpu_custom_call.1} parent=1 // pred_check_branch
      %147 = sbr.rel (0) target = $region29
    $region28: #{tpu_custom_call.1} parent=1 // pred_region
      %148 = dma.done [#allocation4], 128
    $region29: #{tpu_custom_call.1} parent=1 // pred_fallthru
      _
    %149 = vsyncpa [#allocation3], 1
    %150 = vsyncpa [#allocation6], 1
    %151 = vsyncpa [#allocation4], 1

</llo_original>
